<compile_context>
chip_gen: v7x
topology: tpu7x:2x2x1
jax: 0.10.0
libtpu: 0.0.40
codegen_flags: <defaults>
</compile_context>

<pallas_src>
import numpy as np
import jax
import jax.numpy as jnp
from jax.experimental import pallas as pl
from jax.experimental.pallas import tpu as pltpu

_LANES = 128
_SUBLANES = 8


def _deviation_kernel(dev_ref, out_ref):
    # Elementwise exp(10 * x) over the whole tile: the VPU mul and EUP exp
    # occupy different VLIW slots; stores are unmasked and lane-dense.
    # (torch.ones([1,1]) * exp(...) == exp(...), so no ones-broadcast.)
    out_ref[...] = jnp.exp(dev_ref[...] * 10.0)


def _deviation_forward_batched(dev_tile: jax.Array) -> jax.Array:
    """dev_tile: (rows, 128) float32 -> (rows, 128) float32 = exp(10 * x).

    Gridless full-array kernel: the whole tile (a handful of vregs) sits in
    VMEM; adding a grid would only add ~0.35 us/step overhead that exceeds
    the compute.  For very large key counts (>~2M) a 1-D row grid with
    (1024-2048, 128) blocks would be added instead.
    """
    return pl.pallas_call(
        _deviation_kernel,
        out_shape=jax.ShapeDtypeStruct(dev_tile.shape, jnp.float32),
        in_specs=[pl.BlockSpec(memory_space=pltpu.VMEM)],
        out_specs=pl.BlockSpec(memory_space=pltpu.VMEM),
    )(dev_tile)


class DeviationDictPallas:
    """JAX/Pallas equivalent of the PyTorch DeviationDict module.

    All deviations live in a single host-staged (rows, 128) f32 tile; one
    batched Pallas call computes exp(10*x) for every key, the result is
    pulled to host once, and per-name forward() calls are dispatch-free
    NumPy indexing.
    """

    def __init__(self, sequence_names, init_val: float):
        self._names = list(sequence_names)
        self._index = {name: i for i, name in enumerate(self._names)}
        n = max(1, len(self._names))
        # At least one full (8, 128) vreg; grow in multiples of 8 sublanes.
        rows = ((pl.cdiv(n, _LANES) + _SUBLANES - 1) // _SUBLANES) * _SUBLANES
        rows = max(rows, _SUBLANES)
        self._tile_shape = (rows, _LANES)

        # Parameters staged host-side (matches PyTorch __init__: every
        # Parameter starts at init_val).  Uploaded once per compute_all.
        self._host_dev = np.full(self._tile_shape, init_val, dtype=np.float32)

        self._fwd = jax.jit(_deviation_forward_batched)
        self._version = 0          # bumped on every parameter edit
        self._cache_version = -1   # version the caches were computed at
        self._device_cache = None  # device (rows,128) exp(10*x)
        self._host_cache = None    # host NumPy copy for dispatch-free lookups

    # --- parameter access ---------------------------------------------------
    def get_deviation(self, sequence_name: str) -> np.float32:
        r, c = divmod(self._index[sequence_name], _LANES)
        return self._host_dev[r, c]

    def set_deviation(self, sequence_name: str, value) -> None:
        # Host-side staged edit; no device scatter per update.
        r, c = divmod(self._index[sequence_name], _LANES)
        self._host_dev[r, c] = np.float32(value)
        self._version += 1

    @property
    def host_deviations(self) -> np.ndarray:
        """Host-side copy of the packed (rows, 128) parameter tile."""
        return self._host_dev.copy()

    # --- forward -------------------------------------------------------------
    def compute_all(self) -> jax.Array:
        """Run the batched kernel once for every key and cache the result."""
        if self._cache_version != self._version or self._device_cache is None:
            dev_tile = jnp.asarray(self._host_dev)        # one upload per dirty batch
            self._device_cache = self._fwd(dev_tile)       # one Pallas launch
            self._host_cache = np.asarray(self._device_cache)  # one pull to host
            self._cache_version = self._version
        return self._device_cache

    def __call__(self, sequence_name: str) -> np.ndarray:
        if self._cache_version != self._version or self._host_cache is None:
            self.compute_all()
        r, c = divmod(self._index[sequence_name], _LANES)
        # Dispatch-free host lookup; (1,1) float32 matches the torch output
        # shape/dtype (returned as host NumPy to avoid per-key device ops).
        return self._host_cache[r, c].reshape(1, 1)

    @property
    def keys(self):
        return self._index.keys()


if __name__ == "__main__":
    key = jax.random.PRNGKey(0)

    sequence_names = [f"seq_{i}" for i in range(8)]
    init_val = 0.3
    module = DeviationDictPallas(sequence_names, init_val)

    # Deterministic per-key perturbations (stand-in for training updates).
    # Edits are staged host-side and uploaded in a single batch by compute_all.
    perturbs = np.asarray(
        jax.random.normal(key, (len(sequence_names),), dtype=jnp.float32)
    ) * np.float32(0.05)
    for name, p in zip(sequence_names, perturbs):
        module.set_deviation(name, module.get_deviation(name) + p)

    # Run the batched Pallas kernel once and block on it.
    full = jax.block_until_ready(module.compute_all())

    ok = True
    # Per-name forward() checks (dispatch-free lookups into the cached tile).
    for name in sequence_names:
        out = module(name)
        expected = np.exp(
            np.float32(module.get_deviation(name)) * np.float32(10.0)
        ).reshape(1, 1)
        if out.shape != (1, 1) or out.dtype != np.float32:
            ok = False
        if not np.allclose(out, expected, rtol=1e-5, atol=1e-6):
            ok = False

    # Full-tile check against a pure-JAX reference.
    full_ref = jnp.exp(jnp.asarray(module.host_deviations) * 10.0)
    if not jnp.allclose(full, full_ref, rtol=1e-5, atol=1e-6):
        ok = False

    if ok:
        print("KERNEL_OK")
</pallas_src>

<mosaic_0001>
module attributes {stable_mosaic.version = 11 : i64} {
  func.func @_deviation_kernel(%arg0: memref<8x128xf32, #tpu.memory_space<vmem>>, %arg1: memref<8x128xf32, #tpu.memory_space<vmem>>) attributes {dimension_semantics = [], scalar_prefetch = 0 : i64, scratch_operands = 0 : i64, tpu.core_type = #tpu.core_type<tc>} {
    %c0 = arith.constant 0 : index
    %c0_0 = arith.constant 0 : index
    %0 = vector.load %arg0[%c0, %c0_0] : memref<8x128xf32, #tpu.memory_space<vmem>>, vector<8x128xf32>
    %cst = arith.constant 1.000000e+01 : f32
    %1 = vector.broadcast %cst : f32 to vector<8x128xf32>
    %2 = arith.mulf %0, %1 : vector<8x128xf32>
    %3 = math.exp %2 : vector<8x128xf32>
    %c0_1 = arith.constant 0 : index
    %c0_2 = arith.constant 0 : index
    %4 = vector.load %arg1[%c0_1, %c0_2] : memref<8x128xf32, #tpu.memory_space<vmem>>, vector<8x128xf32>
    tpu.vector_store %arg1[%c0_1, %c0_2], %3 {strides = array<i32>} : memref<8x128xf32, #tpu.memory_space<vmem>>, vector<8x128xf32>,
    return
  }
}

</mosaic_0001>

<llo_original>
// kernel: _deviation_forward_batched.1
$region0: #{_deviation_forward_batched.1}
  #allocation0 [shape = 'u32[]', space=smem, size = 0x4, offset = 0x4, fixed_abs, tag = 'smem constant byte address 0x4 - core index']
  #allocation1 [shape = 'u32[144,128]{1,0:T(1,128)}', space=vmem, size = 0x12000, scoped, tag = 'internal scratch']
  %s0 = inlined_call_operand.hbm [shape: f32[8,128], index: 0, kind: input, shape index: {}]
  %s1 = inlined_call_operand.hbm [shape: f32[8,128], index: 1, kind: output, shape index: {}]
  %s2 = sld [smem:[#allocation0]]
  $region18: #{_deviation_forward_batched.1} parent=0
    _
  %s4 = ssub.s32 1, %s2
  %s5 = scalar_select 0, %s4, %s2
  $region1: #{_deviation_forward_batched.1} parent=0
    #allocation2 [shape = 'u8[4096]{0}', space=vmem, size = 0x1000, scoped, tag = 'input window, operand 0, single buffered']
    #allocation3 [shape = 's32[1]{0}', space=sflag, size = 0x4, scoped, tag = 'scoped memory for _deviation_forward_batched.1']
    #allocation4 [shape = 's32[1]{0}', space=sflag, size = 0x4, scoped, tag = 'scoped memory for _deviation_forward_batched.1']
    #allocation5 [shape = 'u8[4096]{0}', space=vmem, size = 0x1000, scoped, tag = 'output window, operand 0, single buffered']
    %6 = vsyncpa [#allocation3], 0
    %7 = vsyncpa [#allocation4], 0
    // Predicated region
    $region2: #{_deviation_forward_batched.1} parent=1 // pred_check
      _
    $region3: #{_deviation_forward_batched.1} parent=1 // pred_check_branch
      %9 = sbr.rel (0) target = $region5
    $region4: #{_deviation_forward_batched.1} parent=1 // pred_region
      %s11 = ssub.s32 128, 128
      %12 = vsyncadd [#allocation3], %s11
      %s14 = sshll.u32 [#allocation2], 4
      %s15 = int_to_ptr.vmem [resolvable:$true] %s14
      %17 = dma.hbm_to_vmem [thread:$0]  %s0, 128, %s15, [#allocation3]
    $region5: #{_deviation_forward_batched.1} parent=1 // pred_fallthru
      _
    // Predicated region
    $region6: #{_deviation_forward_batched.1} parent=1 // pred_check
      _
    $region7: #{_deviation_forward_batched.1} parent=1 // pred_check_branch
      %19 = sbr.rel (0) target = $region9
    $region8: #{_deviation_forward_batched.1} parent=1 // pred_region
      %20 = dma.done [#allocation3], 128
    $region9: #{_deviation_forward_batched.1} parent=1 // pred_fallthru
      _
    %v21 = vld [vmem:[#allocation2] sm:$0xff]
    %v22 = vmul.f32 %v21, 10.0
    %v23 = vmul.f32 %v22, 1.442695
    %v24 = vpow.pop %v23
    %25 = vst [vmem:[#allocation5] sm:$0xff] %v24
    // Predicated region
    $region10: #{_deviation_forward_batched.1} parent=1 // pred_check
      _
    $region11: #{_deviation_forward_batched.1} parent=1 // pred_check_branch
      %27 = sbr.rel (0) target = $region13
    $region12: #{_deviation_forward_batched.1} parent=1 // pred_region
      %s29 = ssub.s32 128, 128
      %30 = vsyncadd [#allocation4], %s29
      %s32 = sshll.u32 [#allocation5], 4
      %s33 = int_to_ptr.vmem [resolvable:$true] %s32
      %35 = dma.vmem_to_hbm [thread:$0]  %s33, 128, %s1, [#allocation4]
    $region13: #{_deviation_forward_batched.1} parent=1 // pred_fallthru
      _
    // Predicated region
    $region14: #{_deviation_forward_batched.1} parent=1 // pred_check
      _
    $region15: #{_deviation_forward_batched.1} parent=1 // pred_check_branch
      %37 = sbr.rel (0) target = $region17
    $region16: #{_deviation_forward_batched.1} parent=1 // pred_region
      %38 = dma.done [#allocation4], 128
    $region17: #{_deviation_forward_batched.1} parent=1 // pred_fallthru
      _
    %39 = vsyncpa [#allocation3], 1
    %40 = vsyncpa [#allocation4], 1

</llo_original>
